<compile_context>
chip_gen: v7x
topology: tpu7x:2x2x1
jax: 0.10.0
libtpu: 0.0.40
codegen_flags: <defaults>
</compile_context>

<pallas_src>
import functools

import jax
import jax.numpy as jnp
from jax.experimental import pallas as pl
from jax.experimental.pallas import tpu as pltpu


def _round_up(n, m):
    return ((n + m - 1) // m) * m


def _mlp_kernel(x_ref, w1_ref, b1_ref, w2_ref, b2_ref, w3_ref, b3_ref, o_ref):
    """Fused 3-layer MLP on one batch tile; everything resident in VMEM.

    Weights are bf16 (MXU operands); accumulation, bias-add and ReLU are f32.
    """
    wdt = w1_ref.dtype
    x = x_ref[...].astype(wdt)

    h1 = jnp.dot(x, w1_ref[...], preferred_element_type=jnp.float32) + b1_ref[...]
    h1 = jnp.maximum(h1, 0.0).astype(wdt)

    h2 = jnp.dot(h1, w2_ref[...], preferred_element_type=jnp.float32) + b2_ref[...]
    h2 = jnp.maximum(h2, 0.0).astype(wdt)

    o_ref[...] = jnp.dot(h2, w3_ref[...], preferred_element_type=jnp.float32) + b3_ref[...]


def init_params(key, inp_size, hidden, out_size, weight_dtype=jnp.bfloat16):
    """PyTorch-nn.Linear-style init (uniform +-1/sqrt(fan_in)).

    Weights are stored already in kernel layout: (in, out), bf16, with w3/b3 padded
    to a 128-lane output dim and biases reshaped to (1, features). This is done ONCE
    here so the per-call forward path has zero weight-massaging ops.
    """
    ks = jax.random.split(key, 6)

    def lin(kw, kb, fan_in, fan_out):
        bound = 1.0 / jnp.sqrt(float(fan_in))
        w = jax.random.uniform(kw, (fan_in, fan_out), jnp.float32, -bound, bound)
        b = jax.random.uniform(kb, (fan_out,), jnp.float32, -bound, bound)
        return w, b

    w1, b1 = lin(ks[0], ks[1], inp_size, hidden)
    w2, b2 = lin(ks[2], ks[3], hidden, hidden)
    w3, b3 = lin(ks[4], ks[5], hidden, out_size)

    out_p = _round_up(out_size, 128)
    w3_p = jnp.zeros((hidden, out_p), jnp.float32).at[:, :out_size].set(w3)
    b3_p = jnp.zeros((1, out_p), jnp.float32).at[:, :out_size].set(b3)

    return {
        "w1": w1.astype(weight_dtype),          # (inp, 128)
        "b1": b1.reshape(1, hidden),            # (1, 128)  f32
        "w2": w2.astype(weight_dtype),          # (128, 128)
        "b2": b2.reshape(1, hidden),            # (1, 128)  f32
        "w3": w3_p.astype(weight_dtype),        # (128, out_p)
        "b3": b3_p,                             # (1, out_p) f32
    }


@functools.partial(jax.jit, static_argnames=("out_size", "tile_b"))
def mountain_car_forward(x, params, *, out_size, tile_b=256):
    """x: [B, inp_size] float32. params: dict from init_params (kernel layout)."""
    B, inp = x.shape
    hidden = params["w2"].shape[0]
    out_p = params["w3"].shape[1]

    # Batch tiling: tile of up to `tile_b` rows (multiple of 8 sublanes).
    b_pad = _round_up(B, 8)
    tb = _round_up(min(tile_b, b_pad), 8)
    b_pad = _round_up(b_pad, tb)
    nb = b_pad // tb

    x = x.astype(jnp.float32)
    x_p = x if b_pad == B else jnp.zeros((b_pad, inp), jnp.float32).at[:B].set(x)

    const = lambda i: (0, 0)  # weights/biases: same block every step -> stay resident

    out_padded = pl.pallas_call(
        _mlp_kernel,
        out_shape=jax.ShapeDtypeStruct((b_pad, out_p), jnp.float32),
        grid=(nb,),
        in_specs=[
            pl.BlockSpec((tb, inp), lambda i: (i, 0)),     # x tile (last dim = full)
            pl.BlockSpec((inp, hidden), const),            # w1 (full array)
            pl.BlockSpec((1, hidden), const),              # b1
            pl.BlockSpec((hidden, hidden), const),         # w2
            pl.BlockSpec((1, hidden), const),              # b2
            pl.BlockSpec((hidden, out_p), const),          # w3 (padded lanes)
            pl.BlockSpec((1, out_p), const),               # b3
        ],
        out_specs=pl.BlockSpec((tb, out_p), lambda i: (i, 0)),   # lane-dense output
        compiler_params=pltpu.CompilerParams(
            dimension_semantics=("parallel",)),
    )(x_p, params["w1"], params["b1"], params["w2"], params["b2"],
      params["w3"], params["b3"])

    return out_padded[:B, :out_size]


def _reference(x, params, out_size):
    """Pure-JAX reference that mirrors the kernel's bf16-operand / f32-accumulate math."""
    f32 = jnp.float32
    is_bf16 = params["w1"].dtype == jnp.bfloat16
    w1 = params["w1"].astype(f32)
    w2 = params["w2"].astype(f32)
    w3 = params["w3"].astype(f32)

    def q(a):  # mimic the bf16 cast of matmul operands
        return a.astype(jnp.bfloat16).astype(f32) if is_bf16 else a

    h1 = jnp.maximum(q(x.astype(f32)) @ w1 + params["b1"], 0.0)
    h2 = jnp.maximum(q(h1) @ w2 + params["b2"], 0.0)
    y = q(h2) @ w3 + params["b3"]
    return y[:, :out_size]


if __name__ == "__main__":
    # MountainCar: observation dim 2, action dim 3.
    inp_size, hidden, out_size = 2, 128, 3

    key = jax.random.PRNGKey(0)
    k_p, k_x1, k_x2 = jax.random.split(key, 3)
    params = init_params(k_p, inp_size, hidden, out_size)

    # Small batch (a handful of envs / one decision step).
    x_small = jax.random.normal(k_x1, (8, inp_size), jnp.float32)
    y_small = mountain_car_forward(x_small, params, out_size=out_size)
    jax.block_until_ready(y_small)
    y_small_ref = _reference(x_small, params, out_size)
    assert y_small.shape == (8, out_size), y_small.shape
    assert jnp.allclose(y_small, y_small_ref, atol=5e-3, rtol=5e-3), "small-batch mismatch"

    # Larger stacked batch: exercises the batch grid axis (2 tiles of 256) + batch padding.
    x_big = jax.random.normal(k_x2, (500, inp_size), jnp.float32)
    y_big = mountain_car_forward(x_big, params, out_size=out_size)
    jax.block_until_ready(y_big)
    y_big_ref = _reference(x_big, params, out_size)
    assert y_big.shape == (500, out_size), y_big.shape
    assert jnp.allclose(y_big, y_big_ref, atol=5e-3, rtol=5e-3), "big-batch mismatch"

    print("KERNEL_OK")
</pallas_src>

<mosaic_0001>
module attributes {stable_mosaic.version = 11 : i64} {
  func.func @_mlp_kernel(%arg0: i32, %arg1: memref<8x2xf32, #tpu.memory_space<vmem>>, %arg2: memref<2x128xbf16, #tpu.memory_space<vmem>>, %arg3: memref<1x128xf32, #tpu.memory_space<vmem>>, %arg4: memref<128x128xbf16, #tpu.memory_space<vmem>>, %arg5: memref<1x128xf32, #tpu.memory_space<vmem>>, %arg6: memref<128x128xbf16, #tpu.memory_space<vmem>>, %arg7: memref<1x128xf32, #tpu.memory_space<vmem>>, %arg8: memref<8x128xf32, #tpu.memory_space<vmem>>) attributes {dimension_semantics = [#tpu.dimension_semantics<parallel>], iteration_bounds = array<i64: 1>, scalar_prefetch = 0 : i64, scratch_operands = 0 : i64, tpu.core_type = #tpu.core_type<tc>, window_params = [{transform_indices = @transform_0, window_bounds = array<i64: 8, 2>}, {pipeline_mode = #tpu.pipeline_mode<synchronous>, transform_indices = @transform_1, window_bounds = array<i64: 2, 128>}, {pipeline_mode = #tpu.pipeline_mode<synchronous>, transform_indices = @transform_2, window_bounds = array<i64: 1, 128>}, {pipeline_mode = #tpu.pipeline_mode<synchronous>, transform_indices = @transform_3, window_bounds = array<i64: 128, 128>}, {pipeline_mode = #tpu.pipeline_mode<synchronous>, transform_indices = @transform_4, window_bounds = array<i64: 1, 128>}, {pipeline_mode = #tpu.pipeline_mode<synchronous>, transform_indices = @transform_5, window_bounds = array<i64: 128, 128>}, {pipeline_mode = #tpu.pipeline_mode<synchronous>, transform_indices = @transform_6, window_bounds = array<i64: 1, 128>}, {transform_indices = @transform_7, window_bounds = array<i64: 8, 128>}]} {
    %c0 = arith.constant 0 : index
    %c0_0 = arith.constant 0 : index
    %0 = vector.load %arg1[%c0, %c0_0] : memref<8x2xf32, #tpu.memory_space<vmem>>, vector<8x2xf32>
    %1 = arith.truncf %0 : vector<8x2xf32> to vector<8x2xbf16>
    %c0_1 = arith.constant 0 : index
    %c0_2 = arith.constant 0 : index
    %2 = vector.load %arg2[%c0_1, %c0_2] : memref<2x128xbf16, #tpu.memory_space<vmem>>, vector<2x128xbf16>
    %cst = arith.constant dense<0.000000e+00> : vector<8x128xf32>
    %3 = tpu.matmul %1, %2, %cst {dimension_numbers = #tpu.dot_dimension_numbers<[1], [0], [0], [1], [0, 0, 1, 1], [], []>} : vector<8x2xbf16>, vector<2x128xbf16>, vector<8x128xf32> -> vector<8x128xf32>
    %c0_3 = arith.constant 0 : index
    %c0_4 = arith.constant 0 : index
    %4 = vector.load %arg3[%c0_3, %c0_4] : memref<1x128xf32, #tpu.memory_space<vmem>>, vector<1x128xf32>
    %5 = vector.broadcast %4 : vector<1x128xf32> to vector<8x128xf32>
    %6 = arith.addf %3, %5 : vector<8x128xf32>
    %cst_5 = arith.constant 0.000000e+00 : f32
    %7 = vector.broadcast %cst_5 : f32 to vector<8x128xf32>
    %8 = arith.maximumf %6, %7 : vector<8x128xf32>
    %9 = arith.truncf %8 : vector<8x128xf32> to vector<8x128xbf16>
    %c0_6 = arith.constant 0 : index
    %c0_7 = arith.constant 0 : index
    %10 = vector.load %arg4[%c0_6, %c0_7] : memref<128x128xbf16, #tpu.memory_space<vmem>>, vector<128x128xbf16>
    %cst_8 = arith.constant dense<0.000000e+00> : vector<8x128xf32>
    %11 = tpu.matmul %9, %10, %cst_8 {dimension_numbers = #tpu.dot_dimension_numbers<[1], [0], [0], [1], [0, 0, 1, 1], [], []>} : vector<8x128xbf16>, vector<128x128xbf16>, vector<8x128xf32> -> vector<8x128xf32>
    %c0_9 = arith.constant 0 : index
    %c0_10 = arith.constant 0 : index
    %12 = vector.load %arg5[%c0_9, %c0_10] : memref<1x128xf32, #tpu.memory_space<vmem>>, vector<1x128xf32>
    %13 = vector.broadcast %12 : vector<1x128xf32> to vector<8x128xf32>
    %14 = arith.addf %11, %13 : vector<8x128xf32>
    %cst_11 = arith.constant 0.000000e+00 : f32
    %15 = vector.broadcast %cst_11 : f32 to vector<8x128xf32>
    %16 = arith.maximumf %14, %15 : vector<8x128xf32>
    %17 = arith.truncf %16 : vector<8x128xf32> to vector<8x128xbf16>
    %c0_12 = arith.constant 0 : index
    %c0_13 = arith.constant 0 : index
    %18 = vector.load %arg6[%c0_12, %c0_13] : memref<128x128xbf16, #tpu.memory_space<vmem>>, vector<128x128xbf16>
    %cst_14 = arith.constant dense<0.000000e+00> : vector<8x128xf32>
    %19 = tpu.matmul %17, %18, %cst_14 {dimension_numbers = #tpu.dot_dimension_numbers<[1], [0], [0], [1], [0, 0, 1, 1], [], []>} : vector<8x128xbf16>, vector<128x128xbf16>, vector<8x128xf32> -> vector<8x128xf32>
    %c0_15 = arith.constant 0 : index
    %c0_16 = arith.constant 0 : index
    %20 = vector.load %arg7[%c0_15, %c0_16] : memref<1x128xf32, #tpu.memory_space<vmem>>, vector<1x128xf32>
    %21 = vector.broadcast %20 : vector<1x128xf32> to vector<8x128xf32>
    %22 = arith.addf %19, %21 : vector<8x128xf32>
    %c0_17 = arith.constant 0 : index
    %c0_18 = arith.constant 0 : index
    %23 = vector.load %arg8[%c0_17, %c0_18] : memref<8x128xf32, #tpu.memory_space<vmem>>, vector<8x128xf32>
    tpu.vector_store %arg8[%c0_17, %c0_18], %22 {strides = array<i32>} : memref<8x128xf32, #tpu.memory_space<vmem>>, vector<8x128xf32>,
    return
  }
  func.func @transform_0(%arg0: i32) -> (i32, i32) {
    %c0_i32 = arith.constant 0 : i32
    %c0_i32_0 = arith.constant 0 : i32
    return %arg0, %c0_i32 : i32, i32
  }
  func.func @transform_1(%arg0: i32) -> (i32, i32) {
    %c0_i32 = arith.constant 0 : i32
    %c0_i32_0 = arith.constant 0 : i32
    %c0_i32_1 = arith.constant 0 : i32
    return %c0_i32, %c0_i32_0 : i32, i32
  }
  func.func @transform_2(%arg0: i32) -> (i32, i32) {
    %c0_i32 = arith.constant 0 : i32
    %c0_i32_0 = arith.constant 0 : i32
    %c0_i32_1 = arith.constant 0 : i32
    return %c0_i32, %c0_i32_0 : i32, i32
  }
  func.func @transform_3(%arg0: i32) -> (i32, i32) {
    %c0_i32 = arith.constant 0 : i32
    %c0_i32_0 = arith.constant 0 : i32
    %c0_i32_1 = arith.constant 0 : i32
    return %c0_i32, %c0_i32_0 : i32, i32
  }
  func.func @transform_4(%arg0: i32) -> (i32, i32) {
    %c0_i32 = arith.constant 0 : i32
    %c0_i32_0 = arith.constant 0 : i32
    %c0_i32_1 = arith.constant 0 : i32
    return %c0_i32, %c0_i32_0 : i32, i32
  }
  func.func @transform_5(%arg0: i32) -> (i32, i32) {
    %c0_i32 = arith.constant 0 : i32
    %c0_i32_0 = arith.constant 0 : i32
    %c0_i32_1 = arith.constant 0 : i32
    return %c0_i32, %c0_i32_0 : i32, i32
  }
  func.func @transform_6(%arg0: i32) -> (i32, i32) {
    %c0_i32 = arith.constant 0 : i32
    %c0_i32_0 = arith.constant 0 : i32
    %c0_i32_1 = arith.constant 0 : i32
    return %c0_i32, %c0_i32_0 : i32, i32
  }
  func.func @transform_7(%arg0: i32) -> (i32, i32) {
    %c0_i32 = arith.constant 0 : i32
    %c0_i32_0 = arith.constant 0 : i32
    return %arg0, %c0_i32 : i32, i32
  }
}

</mosaic_0001>

<llo_original>
// kernel: mountain_car_forward.1
$region0: #{mountain_car_forward.1}
  #allocation0 [shape = 'u32[]', space=smem, size = 0x4, offset = 0x4, fixed_abs, tag = 'smem constant byte address 0x4 - core index']
  #allocation1 [shape = 'u32[144,128]{1,0:T(1,128)}', space=vmem, size = 0x12000, scoped, tag = 'internal scratch']
  %s0 = inlined_call_operand.vmem [shape: f32[8,2], index: 0, kind: input, shape index: {}]
  %s1 = inlined_call_operand.vmem [shape: bf16[2,128], index: 1, kind: input, shape index: {}]
  %s2 = inlined_call_operand.vmem [shape: f32[1,128], index: 2, kind: input, shape index: {}]
  %s3 = inlined_call_operand.hbm [shape: bf16[128,128], index: 3, kind: input, shape index: {}]
  %s4 = inlined_call_operand.vmem [shape: f32[1,128], index: 4, kind: input, shape index: {}]
  %s5 = inlined_call_operand.hbm [shape: bf16[128,128], index: 5, kind: input, shape index: {}]
  %s6 = inlined_call_operand.vmem [shape: f32[1,128], index: 6, kind: input, shape index: {}]
  %s7 = inlined_call_operand.vmem [shape: f32[8,128], index: 7, kind: output, shape index: {}]
  %s8 = sld [smem:[#allocation0]]
  $region46: #{mountain_car_forward.1} parent=0
    _
  %s10 = ssub.s32 1, %s8
  %s11 = scalar_select 0, %s10, %s8
  $region1: #{mountain_car_forward.1} parent=0
    #allocation2 [shape = 'u8[32768]{0}', space=vmem, size = 0x8000, scoped, tag = 'input window, operand 3, single buffered']
    #allocation3 [shape = 's32[1]{0}', space=sflag, size = 0x4, scoped, tag = 'scoped memory for mountain_car_forward.1']
    #allocation4 [shape = 'u8[32768]{0}', space=vmem, size = 0x8000, scoped, tag = 'input window, operand 5, single buffered']
    #allocation5 [shape = 's32[1]{0}', space=sflag, size = 0x4, scoped, tag = 'scoped memory for mountain_car_forward.1']
    %12 = vsyncpa [#allocation3], 0
    %13 = vsyncpa [#allocation5], 0
    // Predicated region
    $region2: #{mountain_car_forward.1} parent=1 // pred_check
      _
    $region3: #{mountain_car_forward.1} parent=1 // pred_check_branch
      %15 = sbr.rel (0) target = $region5
    $region4: #{mountain_car_forward.1} parent=1 // pred_region
      _
    $region5: #{mountain_car_forward.1} parent=1 // pred_fallthru
      _
    // Predicated region
    $region6: #{mountain_car_forward.1} parent=1 // pred_check
      _
    $region7: #{mountain_car_forward.1} parent=1 // pred_check_branch
      %17 = sbr.rel (0) target = $region9
    $region8: #{mountain_car_forward.1} parent=1 // pred_region
      _
    $region9: #{mountain_car_forward.1} parent=1 // pred_fallthru
      _
    // Predicated region
    $region10: #{mountain_car_forward.1} parent=1 // pred_check
      _
    $region11: #{mountain_car_forward.1} parent=1 // pred_check_branch
      %19 = sbr.rel (0) target = $region13
    $region12: #{mountain_car_forward.1} parent=1 // pred_region
      _
    $region13: #{mountain_car_forward.1} parent=1 // pred_fallthru
      _
    // Predicated region
    $region14: #{mountain_car_forward.1} parent=1 // pred_check
      _
    $region15: #{mountain_car_forward.1} parent=1 // pred_check_branch
      %21 = sbr.rel (0) target = $region17
    $region16: #{mountain_car_forward.1} parent=1 // pred_region
      %s23 = ssub.s32 1024, 1024
      %24 = vsyncadd [#allocation3], %s23
      %s25 = sshll.u32 [#allocation2], 4
      %s26 = int_to_ptr.vmem [resolvable:$true] %s25
      %31 = dma.hbm_to_vmem [thread:$0]  %s3, 1024, %s26, [#allocation3], 64, 64, 4
    $region17: #{mountain_car_forward.1} parent=1 // pred_fallthru
      _
    // Predicated region
    $region18: #{mountain_car_forward.1} parent=1 // pred_check
      _
    $region19: #{mountain_car_forward.1} parent=1 // pred_check_branch
      %33 = sbr.rel (0) target = $region21
    $region20: #{mountain_car_forward.1} parent=1 // pred_region
      _
    $region21: #{mountain_car_forward.1} parent=1 // pred_fallthru
      _
    // Predicated region
    $region22: #{mountain_car_forward.1} parent=1 // pred_check
      _
    $region23: #{mountain_car_forward.1} parent=1 // pred_check_branch
      %35 = sbr.rel (0) target = $region25
    $region24: #{mountain_car_forward.1} parent=1 // pred_region
      %s37 = ssub.s32 1024, 1024
      %38 = vsyncadd [#allocation5], %s37
      %s39 = sshll.u32 [#allocation4], 4
      %s40 = int_to_ptr.vmem [resolvable:$true] %s39
      %45 = dma.hbm_to_vmem [thread:$0]  %s5, 1024, %s40, [#allocation5], 64, 64, 4
    $region25: #{mountain_car_forward.1} parent=1 // pred_fallthru
      _
    // Predicated region
    $region26: #{mountain_car_forward.1} parent=1 // pred_check
      _
    $region27: #{mountain_car_forward.1} parent=1 // pred_check_branch
      %47 = sbr.rel (0) target = $region29
    $region28: #{mountain_car_forward.1} parent=1 // pred_region
      _
    $region29: #{mountain_car_forward.1} parent=1 // pred_fallthru
      _
    // Predicated region
    $region30: #{mountain_car_forward.1} parent=1 // pred_check
      _
    $region31: #{mountain_car_forward.1} parent=1 // pred_check_branch
      %49 = sbr.rel (0) target = $region33
    $region32: #{mountain_car_forward.1} parent=1 // pred_region
      %50 = dma.done [#allocation3], 1024
    $region33: #{mountain_car_forward.1} parent=1 // pred_fallthru
      _
    // Predicated region
    $region34: #{mountain_car_forward.1} parent=1 // pred_check
      _
    $region35: #{mountain_car_forward.1} parent=1 // pred_check_branch
      %52 = sbr.rel (0) target = $region37
    $region36: #{mountain_car_forward.1} parent=1 // pred_region
      %53 = dma.done [#allocation5], 1024
    $region37: #{mountain_car_forward.1} parent=1 // pred_fallthru
      _
    %v55 = vld [vmem:[%s0] sm:$0xff]
    %v56 = vpack.c.bf16 %v55, %v55
    %v57 = vld [vmem:[%s1] sm:$0x1]
    %v58 = vld [vmem:[%s2] sm:$0x1]
    %v60 = vlaneseq
    %v61 = vshrl.u32 %v60, 7
    %v62 = vsub.s32 0, %v61
    %v63 = vrot.slane %v58, %v62
    %vm65 = vcmask 15360
    %v67 = vsel %vm65, %v56, 0
    %vm69 = vcmask 1040384
    %v71 = vsel %vm69, %v57, 0
    %73 = vmatprep.subr.bf16.mxu0 0
    %74 = vmatpush1.bf16.msra.mxu0 %v71
    %75 = vmatprep.subr.bf16.mxu0 0
    %76 = vmatpush1.bf16.msra.mxu0 0
    %77 = vmatprep.subr.bf16.mxu0 0
    %78 = vmatpush1.bf16.msra.mxu0 0
    %79 = vmatprep.subr.bf16.mxu0 0
    %80 = vmatpush1.bf16.msra.mxu0 0
    %81 = vmatprep.subr.bf16.mxu0 0
    %82 = vmatpush1.bf16.msra.mxu0 0
    %83 = vmatprep.subr.bf16.mxu0 0
    %84 = vmatpush1.bf16.msra.mxu0 0
    %85 = vmatprep.subr.bf16.mxu0 0
    %86 = vmatpush1.bf16.msra.mxu0 0
    %87 = vmatprep.subr.bf16.mxu0 0
    %88 = vmatpush1.bf16.msra.mxu0 0
    %89 = vmatprep.subr.bf16.mxu0 0
    %90 = vmatpush1.bf16.msra.mxu0 0
    %91 = vmatprep.subr.bf16.mxu0 0
    %92 = vmatpush1.bf16.msra.mxu0 0
    %93 = vmatprep.subr.bf16.mxu0 0
    %94 = vmatpush1.bf16.msra.mxu0 0
    %95 = vmatprep.subr.bf16.mxu0 0
    %96 = vmatpush1.bf16.msra.mxu0 0
    %97 = vmatprep.subr.bf16.mxu0 0
    %98 = vmatpush1.bf16.msra.mxu0 0
    %99 = vmatprep.subr.bf16.mxu0 0
    %100 = vmatpush1.bf16.msra.mxu0 0
    %101 = vmatprep.subr.bf16.mxu0 0
    %102 = vmatpush1.bf16.msra.mxu0 0
    %103 = vmatprep.subr.bf16.mxu0 0
    %104 = vmatpush1.bf16.msra.mxu0 0
    %105 = vmatprep.mubr.bf16.mxu0 0
    %106 = vmatmul.mubr.bf16.gmra.mrb[0].mxu0 %v67
    %v107 = vpop.f32.mrb[0].mxu0
    %v108 = vadd.f32 %v63, %v107
    %v109 = vpop.f32.mrb[0].mxu0
    %v110 = vpop.f32.mrb[0].mxu0
    %v111 = vpop.f32.mrb[0].mxu0
    %112 = vdwg.mxu0
    %v113 = vmax.f32 %v108, 0.0
    %v114 = vpack.c.bf16 %v113, %v113
    %v115 = vld [vmem:[#allocation2] sm:$0xf]
    %v116 = vld [vmem:[#allocation2 + $0x4] sm:$0xf]
    %v117 = vld [vmem:[#allocation2 + $0x8] sm:$0xf]
    %v118 = vld [vmem:[#allocation2 + $0xc] sm:$0xf]
    %v119 = vld [vmem:[#allocation2 + $0x10] sm:$0xf]
    %v120 = vld [vmem:[#allocation2 + $0x14] sm:$0xf]
    %v121 = vld [vmem:[#allocation2 + $0x18] sm:$0xf]
    %v122 = vld [vmem:[#allocation2 + $0x1c] sm:$0xf]
    %v123 = vld [vmem:[#allocation2 + $0x20] sm:$0xf]
    %v124 = vld [vmem:[#allocation2 + $0x24] sm:$0xf]
    %v125 = vld [vmem:[#allocation2 + $0x28] sm:$0xf]
    %v126 = vld [vmem:[#allocation2 + $0x2c] sm:$0xf]
    %v127 = vld [vmem:[#allocation2 + $0x30] sm:$0xf]
    %v128 = vld [vmem:[#allocation2 + $0x34] sm:$0xf]
    %v129 = vld [vmem:[#allocation2 + $0x38] sm:$0xf]
    %v130 = vld [vmem:[#allocation2 + $0x3c] sm:$0xf]
    %v131 = vld [vmem:[%s4] sm:$0x1]
    %v133 = vlaneseq
    %v134 = vshrl.u32 %v133, 7
    %v135 = vsub.s32 0, %v134
    %v136 = vrot.slane %v131, %v135
    %v154 = vunpack.c.l.b16 %v115
    %v155 = vunpack.c.l.b16 %v116
    %v156 = vunpack.c.l.b16 %v117
    %v157 = vunpack.c.l.b16 %v118
    %v158 = vunpack.c.l.b16 %v119
    %v159 = vunpack.c.l.b16 %v120
    %v160 = vunpack.c.l.b16 %v121
    %v161 = vunpack.c.l.b16 %v122
    %v162 = vunpack.c.l.b16 %v123
    %v163 = vunpack.c.l.b16 %v124
    %v164 = vunpack.c.l.b16 %v125
    %v165 = vunpack.c.l.b16 %v126
    %v166 = vunpack.c.l.b16 %v127
    %v167 = vunpack.c.l.b16 %v128
    %v168 = vunpack.c.l.b16 %v129
    %v169 = vunpack.c.l.b16 %v130
    %v170 = vpack.c.b16 %v155, %v154
    %v171 = vpack.c.b16 %v157, %v156
    %v172 = vpack.c.b16 %v159, %v158
    %v173 = vpack.c.b16 %v161, %v160
    %v174 = vpack.c.b16 %v163, %v162
    %v175 = vpack.c.b16 %v165, %v164
    %v176 = vpack.c.b16 %v167, %v166
    %v177 = vpack.c.b16 %v169, %v168
    %186 = vmatprep.subr.bf16.mxu0 0
    %187 = vmatpush1.bf16.msra.mxu0 %v170
    %188 = vmatprep.subr.bf16.mxu0 0
    %189 = vmatpush1.bf16.msra.mxu0 %v171
    %190 = vmatprep.subr.bf16.mxu0 0
    %191 = vmatpush1.bf16.msra.mxu0 %v172
    %192 = vmatprep.subr.bf16.mxu0 0
    %193 = vmatpush1.bf16.msra.mxu0 %v173
    %194 = vmatprep.subr.bf16.mxu0 0
    %195 = vmatpush1.bf16.msra.mxu0 %v174
    %196 = vmatprep.subr.bf16.mxu0 0
    %197 = vmatpush1.bf16.msra.mxu0 %v175
    %198 = vmatprep.subr.bf16.mxu0 0
    %199 = vmatpush1.bf16.msra.mxu0 %v176
    %200 = vmatprep.subr.bf16.mxu0 0
    %201 = vmatpush1.bf16.msra.mxu0 %v177
    %202 = vmatprep.subr.bf16.mxu0 0
    %203 = vmatpush1.bf16.msra.mxu0 0
    %204 = vmatprep.subr.bf16.mxu0 0
    %205 = vmatpush1.bf16.msra.mxu0 0
    %206 = vmatprep.subr.bf16.mxu0 0
    %207 = vmatpush1.bf16.msra.mxu0 0
    %208 = vmatprep.subr.bf16.mxu0 0
    %209 = vmatpush1.bf16.msra.mxu0 0
    %210 = vmatprep.subr.bf16.mxu0 0
    %211 = vmatpush1.bf16.msra.mxu0 0
    %212 = vmatprep.subr.bf16.mxu0 0
    %213 = vmatpush1.bf16.msra.mxu0 0
    %214 = vmatprep.subr.bf16.mxu0 0
    %215 = vmatpush1.bf16.msra.mxu0 0
    %216 = vmatprep.subr.bf16.mxu0 0
    %217 = vmatpush1.bf16.msra.mxu0 0
    %218 = vmatprep.mubr.bf16.mxu0 0
    %219 = vmatmul.mubr.bf16.gmra.mrb[0].mxu0 %v114
    %v220 = vpop.f32.mrb[0].mxu0
    %v221 = vadd.f32 %v136, %v220
    %v222 = vpop.f32.mrb[0].mxu0
    %v223 = vpop.f32.mrb[0].mxu0
    %v224 = vpop.f32.mrb[0].mxu0
    %225 = vdwg.mxu0
    %v226 = vmax.f32 %v221, 0.0
    %v227 = vpack.c.bf16 %v226, %v226
    %v228 = vld [vmem:[#allocation4] sm:$0xf]
    %v229 = vld [vmem:[#allocation4 + $0x4] sm:$0xf]
    %v230 = vld [vmem:[#allocation4 + $0x8] sm:$0xf]
    %v231 = vld [vmem:[#allocation4 + $0xc] sm:$0xf]
    %v232 = vld [vmem:[#allocation4 + $0x10] sm:$0xf]
    %v233 = vld [vmem:[#allocation4 + $0x14] sm:$0xf]
    %v234 = vld [vmem:[#allocation4 + $0x18] sm:$0xf]
    %v235 = vld [vmem:[#allocation4 + $0x1c] sm:$0xf]
    %v236 = vld [vmem:[#allocation4 + $0x20] sm:$0xf]
    %v237 = vld [vmem:[#allocation4 + $0x24] sm:$0xf]
    %v238 = vld [vmem:[#allocation4 + $0x28] sm:$0xf]
    %v239 = vld [vmem:[#allocation4 + $0x2c] sm:$0xf]
    %v240 = vld [vmem:[#allocation4 + $0x30] sm:$0xf]
    %v241 = vld [vmem:[#allocation4 + $0x34] sm:$0xf]
    %v242 = vld [vmem:[#allocation4 + $0x38] sm:$0xf]
    %v243 = vld [vmem:[#allocation4 + $0x3c] sm:$0xf]
    %v244 = vld [vmem:[%s6] sm:$0x1]
    %v246 = vlaneseq
    %v247 = vshrl.u32 %v246, 7
    %v248 = vsub.s32 0, %v247
    %v249 = vrot.slane %v244, %v248
    %v267 = vunpack.c.l.b16 %v228
    %v268 = vunpack.c.l.b16 %v229
    %v269 = vunpack.c.l.b16 %v230
    %v270 = vunpack.c.l.b16 %v231
    %v271 = vunpack.c.l.b16 %v232
    %v272 = vunpack.c.l.b16 %v233
    %v273 = vunpack.c.l.b16 %v234
    %v274 = vunpack.c.l.b16 %v235
    %v275 = vunpack.c.l.b16 %v236
    %v276 = vunpack.c.l.b16 %v237
    %v277 = vunpack.c.l.b16 %v238
    %v278 = vunpack.c.l.b16 %v239
    %v279 = vunpack.c.l.b16 %v240
    %v280 = vunpack.c.l.b16 %v241
    %v281 = vunpack.c.l.b16 %v242
    %v282 = vunpack.c.l.b16 %v243
    %v283 = vpack.c.b16 %v268, %v267
    %v284 = vpack.c.b16 %v270, %v269
    %v285 = vpack.c.b16 %v272, %v271
    %v286 = vpack.c.b16 %v274, %v273
    %v287 = vpack.c.b16 %v276, %v275
    %v288 = vpack.c.b16 %v278, %v277
    %v289 = vpack.c.b16 %v280, %v279
    %v290 = vpack.c.b16 %v282, %v281
    %299 = vmatprep.subr.bf16.mxu0 0
    %300 = vmatpush1.bf16.msra.mxu0 %v283
    %301 = vmatprep.subr.bf16.mxu0 0
    %302 = vmatpush1.bf16.msra.mxu0 %v284
    %303 = vmatprep.subr.bf16.mxu0 0
    %304 = vmatpush1.bf16.msra.mxu0 %v285
    %305 = vmatprep.subr.bf16.mxu0 0
    %306 = vmatpush1.bf16.msra.mxu0 %v286
    %307 = vmatprep.subr.bf16.mxu0 0
    %308 = vmatpush1.bf16.msra.mxu0 %v287
    %309 = vmatprep.subr.bf16.mxu0 0
    %310 = vmatpush1.bf16.msra.mxu0 %v288
    %311 = vmatprep.subr.bf16.mxu0 0
    %312 = vmatpush1.bf16.msra.mxu0 %v289
    %313 = vmatprep.subr.bf16.mxu0 0
    %314 = vmatpush1.bf16.msra.mxu0 %v290
    %315 = vmatprep.subr.bf16.mxu0 0
    %316 = vmatpush1.bf16.msra.mxu0 0
    %317 = vmatprep.subr.bf16.mxu0 0
    %318 = vmatpush1.bf16.msra.mxu0 0
    %319 = vmatprep.subr.bf16.mxu0 0
    %320 = vmatpush1.bf16.msra.mxu0 0
    %321 = vmatprep.subr.bf16.mxu0 0
    %322 = vmatpush1.bf16.msra.mxu0 0
    %323 = vmatprep.subr.bf16.mxu0 0
    %324 = vmatpush1.bf16.msra.mxu0 0
    %325 = vmatprep.subr.bf16.mxu0 0
    %326 = vmatpush1.bf16.msra.mxu0 0
    %327 = vmatprep.subr.bf16.mxu0 0
    %328 = vmatpush1.bf16.msra.mxu0 0
    %329 = vmatprep.subr.bf16.mxu0 0
    %330 = vmatpush1.bf16.msra.mxu0 0
    %331 = vmatprep.mubr.bf16.mxu0 0
    %332 = vmatmul.mubr.bf16.gmra.mrb[0].mxu0 %v227
    %v333 = vpop.f32.mrb[0].mxu0
    %v334 = vadd.f32 %v249, %v333
    %v335 = vpop.f32.mrb[0].mxu0
    %v336 = vpop.f32.mrb[0].mxu0
    %v337 = vpop.f32.mrb[0].mxu0
    %338 = vdwg.mxu0
    %339 = vst [vmem:[%s7] sm:$0xff] %v334
    // Predicated region
    $region38: #{mountain_car_forward.1} parent=1 // pred_check
      _
    $region39: #{mountain_car_forward.1} parent=1 // pred_check_branch
      %341 = sbr.rel (0) target = $region41
    $region40: #{mountain_car_forward.1} parent=1 // pred_region
      _
    $region41: #{mountain_car_forward.1} parent=1 // pred_fallthru
      _
    // Predicated region
    $region42: #{mountain_car_forward.1} parent=1 // pred_check
      _
    $region43: #{mountain_car_forward.1} parent=1 // pred_check_branch
      %343 = sbr.rel (0) target = $region45
    $region44: #{mountain_car_forward.1} parent=1 // pred_region
      _
    $region45: #{mountain_car_forward.1} parent=1 // pred_fallthru
      _
    %344 = vsyncpa [#allocation3], 1
    %345 = vsyncpa [#allocation5], 1

</llo_original>
